<compile_context>
chip_gen: v7x
topology: tpu7x:2x2x1
jax: 0.10.0
libtpu: 0.0.40
codegen_flags: <defaults>
</compile_context>

<pallas_src>
from math import sqrt

import jax
import jax.numpy as jnp
from jax import lax
from jax.experimental import pallas as pl
from jax.experimental.pallas import tpu as pltpu


def _round_up(x, m):
    return ((x + m - 1) // m) * m


def _cdiv(a, b):
    return -(-a // b)


def _pad_2d(a, rows, cols, dtype=None):
    """Zero-pad a 2-D array to (rows, cols) and optionally cast.  No-op copy
    is skipped when the array is already the right shape/dtype."""
    dtype = dtype or a.dtype
    a = a.astype(dtype)
    if a.shape == (rows, cols):
        return a
    return jnp.zeros((rows, cols), dtype).at[:a.shape[0], :a.shape[1]].set(a)


def _want_multi_program():
    """True on chips with >1 TensorCore per device (megacore / v7x-style),
    where a 'parallel' grid axis is sharded across cores."""
    try:
        kind = jax.devices()[0].device_kind.lower()
    except Exception:
        return False
    return any(tag in kind for tag in ("v7", "v4", "v3"))


def _hash_keep_mask(shape, seed, row0, layer_salt):
    """Fallback Bernoulli(0.5) keep mask (non-TPU / interpret only): counter
    hash with LOGICAL shifts and a single finalizer round."""
    row = lax.broadcasted_iota(jnp.int32, shape, 0) + row0
    col = lax.broadcasted_iota(jnp.int32, shape, 1)
    h = (row * jnp.int32(0x1E35A7BD)
         + col * jnp.int32(0x27D4EB2F)
         + seed + jnp.int32(layer_salt))
    h = (h ^ lax.shift_right_logical(h, 16)) * jnp.int32(0x45D9F3B)
    h = h ^ lax.shift_right_logical(h, 15)
    return (lax.shift_right_logical(h, 11) & 1) == 0


def _make_prenet_kernel(n_layers, tm, compute_dtype, use_hw_prng, emit_masks):
    def kernel(seed_ref, x_ref, *rest):
        w_refs = rest[:n_layers]
        o_ref = rest[n_layers]
        m_refs = rest[n_layers + 1: n_layers + 1 + n_layers] if emit_masks else ()

        seed = seed_ref[0]
        if use_hw_prng:
            # Seed once per (seed, tile); each prng_random_bits call advances
            # the stream, so per-layer bits are independent.
            pltpu.prng_seed(seed + pl.program_id(0) * 7919)
        row0 = pl.program_id(0) * tm  # only used by the hash fallback

        h = x_ref[...]
        for l in range(n_layers):
            # Weights are already padded + pre-cast to compute_dtype.
            y = jnp.dot(h.astype(compute_dtype), w_refs[l][...],
                        preferred_element_type=jnp.float32)
            if use_hw_prng:
                bits = pltpu.prng_random_bits(y.shape)
                keep = (bits & 1) == 0                      # Bernoulli(0.5)
            else:
                keep = _hash_keep_mask(y.shape, seed, row0,
                                       (l + 1) * 0x632BE5A)
            # relu(dropout(y)) folded into one select; kept values * 1/(1-p)=2.
            h = jnp.where(keep & (y > 0.0), y * 2.0, 0.0)
            if emit_masks:
                m_refs[l][...] = keep.astype(m_refs[l].dtype)
        o_ref[...] = h.astype(o_ref.dtype)
    return kernel


def prenet_forward(x, weights, seed=0, *, tile_m=512,
                   compute_dtype=jnp.bfloat16, out_dtype=None,
                   return_masks=False, use_hw_prng=None):
    """Fused Prenet: relu(dropout_{p=0.5}(x @ W_i)) for every layer, one kernel.

    x:       [B, in_dim]
    weights: list of [in_i, out_i] matrices (already transposed for x @ W).
    return_masks: also return the per-layer keep masks (debug / testing).
    """
    B, in_dim = x.shape
    n_layers = len(weights)
    dims = [in_dim] + [w.shape[1] for w in weights]
    for i, w in enumerate(weights):
        assert w.shape[0] == dims[i], "weight shapes must chain"

    if use_hw_prng is None:
        use_hw_prng = jax.devices()[0].platform == "tpu"

    # Feature dims -> lane-dense multiples of 128.  Exact: linears are
    # bias-free and padded inputs/weights are zero, so padding never leaks.
    dims_p = [_round_up(d, 128) for d in dims]

    # Row tiling: clamp to the 8-padded batch, balance tiles so row padding is
    # at most 8*(n_tiles-1) (never B -> tile_m), and split into >=2 parallel
    # programs on multi-TensorCore chips so both cores are used.
    b8 = _round_up(B, 8)
    n_tiles = max(1, _cdiv(b8, tile_m))
    if n_tiles == 1 and b8 >= 16 and _want_multi_program():
        n_tiles = 2
    tm = _round_up(_cdiv(b8, n_tiles), 8)
    b_p = n_tiles * tm

    x_p = _pad_2d(x, b_p, dims_p[0])                       # keep x dtype
    # Weights: pad + pre-cast to MXU compute dtype ONCE (amortized over tiles).
    w_p = [_pad_2d(w, dims_p[i], dims_p[i + 1], compute_dtype)
           for i, w in enumerate(weights)]

    out_dtype = out_dtype or x.dtype
    kernel = _make_prenet_kernel(n_layers, tm, compute_dtype,
                                 use_hw_prng, return_masks)

    out_specs = pl.BlockSpec((tm, dims_p[-1]), lambda i, *_: (i, 0))
    out_shape = jax.ShapeDtypeStruct((b_p, dims_p[-1]), out_dtype)
    if return_masks:
        out_specs = [out_specs] + [
            pl.BlockSpec((tm, dims_p[l + 1]), lambda i, *_: (i, 0))
            for l in range(n_layers)]
        out_shape = (out_shape,) + tuple(
            jax.ShapeDtypeStruct((b_p, dims_p[l + 1]), jnp.float32)
            for l in range(n_layers))

    grid_spec = pltpu.PrefetchScalarGridSpec(
        num_scalar_prefetch=1,                              # seed -> SMEM
        grid=(n_tiles,),
        in_specs=[pl.BlockSpec((tm, dims_p[0]), lambda i, *_: (i, 0))]
                 + [pl.BlockSpec((dims_p[l], dims_p[l + 1]),
                                 lambda i, *_: (0, 0))      # weights pinned
                    for l in range(n_layers)],
        out_specs=out_specs,
    )

    res = pl.pallas_call(
        kernel,
        out_shape=out_shape,
        grid_spec=grid_spec,
        compiler_params=pltpu.CompilerParams(
            dimension_semantics=("parallel",)),
    )(jnp.asarray([seed], dtype=jnp.int32), x_p, *w_p)

    if return_masks:
        out = res[0][:B, :dims[-1]]
        masks = [res[1 + l][:B, :dims[l + 1]] for l in range(n_layers)]
        return out, masks
    return res[:B, :dims[-1]]


def _reference_forward(x, weights, masks, compute_dtype=jnp.bfloat16):
    """Pure-JAX mirror using the exact keep masks produced by the kernel."""
    h = x
    for w, m in zip(weights, masks):
        y = jnp.dot(h.astype(compute_dtype), w.astype(compute_dtype),
                    preferred_element_type=jnp.float32)
        h = jnp.where((m > 0.5) & (y > 0.0), y * 2.0, 0.0)
    return h.astype(x.dtype)


def xavier_uniform(key, fan_in, fan_out, dtype=jnp.float32):
    # gain = 1.0 for nonlinearity='linear'; torch stores [out, in] -> transpose.
    bound = sqrt(6.0 / (fan_in + fan_out))
    w = jax.random.uniform(key, (fan_out, fan_in), dtype=dtype,
                           minval=-bound, maxval=bound)
    return w.T  # [in, out] for x @ W


if __name__ == "__main__":
    # Small shapes consistent with Prenet(in_dim, sizes=[h, h]).
    B, in_dim, sizes = 8, 32, [64, 64]

    key = jax.random.PRNGKey(0)
    k_x, k_w0, k_w1 = jax.random.split(key, 3)
    x = jax.random.normal(k_x, (B, in_dim), dtype=jnp.float32)

    in_sizes = [in_dim] + sizes[:-1]
    weights = [xavier_uniform(k, fi, fo)
               for k, fi, fo in zip([k_w0, k_w1], in_sizes, sizes)]

    out, masks = prenet_forward(x, weights, seed=1234, return_masks=True)
    out = jax.block_until_ready(out)

    assert out.shape == (B, sizes[-1])
    assert bool(jnp.all(out >= 0.0))              # relu output is non-negative
    assert bool(jnp.all(jnp.isfinite(out)))

    # Dropout keep rate should be ~0.5 (sanity check on the HW PRNG bits).
    for m in masks:
        frac = float(jnp.mean(m))
        assert 0.25 < frac < 0.75, f"suspicious keep fraction {frac}"

    # Numerical cross-check: replay the kernel's exact masks in pure JAX.
    ref = _reference_forward(x, weights, masks)
    assert jnp.allclose(out, ref, rtol=5e-2, atol=1e-2)

    print("KERNEL_OK")
</pallas_src>

<mosaic_0001>
module attributes {stable_mosaic.version = 11 : i64} {
  func.func @kernel(%arg0: i32, %arg1: memref<1xi32, #tpu.memory_space<smem>>, %arg2: memref<8x128xf32, #tpu.memory_space<vmem>>, %arg3: memref<128x128xbf16, #tpu.memory_space<vmem>>, %arg4: memref<128x128xbf16, #tpu.memory_space<vmem>>, %arg5: memref<8x128xf32, #tpu.memory_space<vmem>>, %arg6: memref<8x128xf32, #tpu.memory_space<vmem>>, %arg7: memref<8x128xf32, #tpu.memory_space<vmem>>) attributes {dimension_semantics = [#tpu.dimension_semantics<parallel>], iteration_bounds = array<i64: 1>, scalar_prefetch = 1 : i64, scratch_operands = 0 : i64, tpu.core_type = #tpu.core_type<tc>, window_params = [{transform_indices = @transform_0, window_bounds = array<i64: 8, 128>}, {pipeline_mode = #tpu.pipeline_mode<synchronous>, transform_indices = @transform_1, window_bounds = array<i64: 128, 128>}, {pipeline_mode = #tpu.pipeline_mode<synchronous>, transform_indices = @transform_2, window_bounds = array<i64: 128, 128>}, {transform_indices = @transform_3, window_bounds = array<i64: 8, 128>}, {transform_indices = @transform_4, window_bounds = array<i64: 8, 128>}, {transform_indices = @transform_5, window_bounds = array<i64: 8, 128>}]} {
    %c0 = arith.constant 0 : index
    %0 = memref.load %arg1[%c0] : memref<1xi32, #tpu.memory_space<smem>>
    %c8_i32 = arith.constant 8 : i32
    %1 = arith.muli %arg0, %c8_i32 : i32
    %c0_0 = arith.constant 0 : index
    %c0_1 = arith.constant 0 : index
    %2 = vector.load %arg2[%c0_0, %c0_1] : memref<8x128xf32, #tpu.memory_space<vmem>>, vector<8x128xf32>
    %3 = arith.truncf %2 : vector<8x128xf32> to vector<8x128xbf16>
    %c0_2 = arith.constant 0 : index
    %c0_3 = arith.constant 0 : index
    %4 = vector.load %arg3[%c0_2, %c0_3] : memref<128x128xbf16, #tpu.memory_space<vmem>>, vector<128x128xbf16>
    %cst = arith.constant dense<0.000000e+00> : vector<8x128xf32>
    %5 = tpu.matmul %3, %4, %cst {dimension_numbers = #tpu.dot_dimension_numbers<[1], [0], [0], [1], [0, 0, 1, 1], [], []>} : vector<8x128xbf16>, vector<128x128xbf16>, vector<8x128xf32> -> vector<8x128xf32>
    %6 = tpu.iota {dimensions = array<i32: 0>} : vector<8x128xi32>
    %7 = vector.broadcast %1 : i32 to vector<8x128xi32>
    %8 = arith.addi %6, %7 : vector<8x128xi32>
    %9 = tpu.iota {dimensions = array<i32: 1>} : vector<8x128xi32>
    %c506832829_i32 = arith.constant 506832829 : i32
    %10 = vector.broadcast %c506832829_i32 : i32 to vector<8x128xi32>
    %11 = arith.muli %8, %10 : vector<8x128xi32>
    %c668265263_i32 = arith.constant 668265263 : i32
    %12 = vector.broadcast %c668265263_i32 : i32 to vector<8x128xi32>
    %13 = arith.muli %9, %12 : vector<8x128xi32>
    %14 = arith.addi %11, %13 : vector<8x128xi32>
    %15 = vector.broadcast %0 : i32 to vector<8x128xi32>
    %16 = arith.addi %14, %15 : vector<8x128xi32>
    %c103988826_i32 = arith.constant 103988826 : i32
    %17 = vector.broadcast %c103988826_i32 : i32 to vector<8x128xi32>
    %18 = arith.addi %16, %17 : vector<8x128xi32>
    %c16_i32 = arith.constant 16 : i32
    %19 = vector.broadcast %c16_i32 : i32 to vector<8x128xi32>
    %20 = arith.shrui %18, %19 : vector<8x128xi32>
    %21 = arith.xori %18, %20 : vector<8x128xi32>
    %c73244475_i32 = arith.constant 73244475 : i32
    %22 = vector.broadcast %c73244475_i32 : i32 to vector<8x128xi32>
    %23 = arith.muli %21, %22 : vector<8x128xi32>
    %c15_i32 = arith.constant 15 : i32
    %24 = vector.broadcast %c15_i32 : i32 to vector<8x128xi32>
    %25 = arith.shrui %23, %24 : vector<8x128xi32>
    %26 = arith.xori %23, %25 : vector<8x128xi32>
    %c11_i32 = arith.constant 11 : i32
    %27 = vector.broadcast %c11_i32 : i32 to vector<8x128xi32>
    %28 = arith.shrui %26, %27 : vector<8x128xi32>
    %c1_i32 = arith.constant 1 : i32
    %29 = vector.broadcast %c1_i32 : i32 to vector<8x128xi32>
    %30 = arith.andi %28, %29 : vector<8x128xi32>
    %c0_i32 = arith.constant 0 : i32
    %31 = vector.broadcast %c0_i32 : i32 to vector<8x128xi32>
    %32 = arith.cmpi eq, %30, %31 : vector<8x128xi32>
    %cst_4 = arith.constant 0.000000e+00 : f32
    %33 = vector.broadcast %cst_4 : f32 to vector<8x128xf32>
    %34 = arith.cmpf ogt, %5, %33 : vector<8x128xf32>
    %35 = arith.andi %32, %34 : vector<8x128xi1>
    %cst_5 = arith.constant 2.000000e+00 : f32
    %36 = vector.broadcast %cst_5 : f32 to vector<8x128xf32>
    %37 = arith.mulf %5, %36 : vector<8x128xf32>
    %cst_6 = arith.constant 0.000000e+00 : f32
    %38 = vector.broadcast %cst_6 : f32 to vector<8x128xf32>
    %39 = arith.select %35, %37, %38 : vector<8x128xi1>, vector<8x128xf32>
    %40 = arith.extui %32 : vector<8x128xi1> to vector<8x128xi32>
    %41 = arith.sitofp %40 : vector<8x128xi32> to vector<8x128xf32>
    %c0_7 = arith.constant 0 : index
    %c0_8 = arith.constant 0 : index
    %42 = vector.load %arg6[%c0_7, %c0_8] : memref<8x128xf32, #tpu.memory_space<vmem>>, vector<8x128xf32>
    tpu.vector_store %arg6[%c0_7, %c0_8], %41 {strides = array<i32>} : memref<8x128xf32, #tpu.memory_space<vmem>>, vector<8x128xf32>,
    %43 = arith.truncf %39 : vector<8x128xf32> to vector<8x128xbf16>
    %c0_9 = arith.constant 0 : index
    %c0_10 = arith.constant 0 : index
    %44 = vector.load %arg4[%c0_9, %c0_10] : memref<128x128xbf16, #tpu.memory_space<vmem>>, vector<128x128xbf16>
    %cst_11 = arith.constant dense<0.000000e+00> : vector<8x128xf32>
    %45 = tpu.matmul %43, %44, %cst_11 {dimension_numbers = #tpu.dot_dimension_numbers<[1], [0], [0], [1], [0, 0, 1, 1], [], []>} : vector<8x128xbf16>, vector<128x128xbf16>, vector<8x128xf32> -> vector<8x128xf32>
    %46 = tpu.iota {dimensions = array<i32: 0>} : vector<8x128xi32>
    %47 = vector.broadcast %1 : i32 to vector<8x128xi32>
    %48 = arith.addi %46, %47 : vector<8x128xi32>
    %49 = tpu.iota {dimensions = array<i32: 1>} : vector<8x128xi32>
    %c506832829_i32_12 = arith.constant 506832829 : i32
    %50 = vector.broadcast %c506832829_i32_12 : i32 to vector<8x128xi32>
    %51 = arith.muli %48, %50 : vector<8x128xi32>
    %c668265263_i32_13 = arith.constant 668265263 : i32
    %52 = vector.broadcast %c668265263_i32_13 : i32 to vector<8x128xi32>
    %53 = arith.muli %49, %52 : vector<8x128xi32>
    %54 = arith.addi %51, %53 : vector<8x128xi32>
    %55 = vector.broadcast %0 : i32 to vector<8x128xi32>
    %56 = arith.addi %54, %55 : vector<8x128xi32>
    %c207977652_i32 = arith.constant 207977652 : i32
    %57 = vector.broadcast %c207977652_i32 : i32 to vector<8x128xi32>
    %58 = arith.addi %56, %57 : vector<8x128xi32>
    %c16_i32_14 = arith.constant 16 : i32
    %59 = vector.broadcast %c16_i32_14 : i32 to vector<8x128xi32>
    %60 = arith.shrui %58, %59 : vector<8x128xi32>
    %61 = arith.xori %58, %60 : vector<8x128xi32>
    %c73244475_i32_15 = arith.constant 73244475 : i32
    %62 = vector.broadcast %c73244475_i32_15 : i32 to vector<8x128xi32>
    %63 = arith.muli %61, %62 : vector<8x128xi32>
    %c15_i32_16 = arith.constant 15 : i32
    %64 = vector.broadcast %c15_i32_16 : i32 to vector<8x128xi32>
    %65 = arith.shrui %63, %64 : vector<8x128xi32>
    %66 = arith.xori %63, %65 : vector<8x128xi32>
    %c11_i32_17 = arith.constant 11 : i32
    %67 = vector.broadcast %c11_i32_17 : i32 to vector<8x128xi32>
    %68 = arith.shrui %66, %67 : vector<8x128xi32>
    %c1_i32_18 = arith.constant 1 : i32
    %69 = vector.broadcast %c1_i32_18 : i32 to vector<8x128xi32>
    %70 = arith.andi %68, %69 : vector<8x128xi32>
    %c0_i32_19 = arith.constant 0 : i32
    %71 = vector.broadcast %c0_i32_19 : i32 to vector<8x128xi32>
    %72 = arith.cmpi eq, %70, %71 : vector<8x128xi32>
    %cst_20 = arith.constant 0.000000e+00 : f32
    %73 = vector.broadcast %cst_20 : f32 to vector<8x128xf32>
    %74 = arith.cmpf ogt, %45, %73 : vector<8x128xf32>
    %75 = arith.andi %72, %74 : vector<8x128xi1>
    %cst_21 = arith.constant 2.000000e+00 : f32
    %76 = vector.broadcast %cst_21 : f32 to vector<8x128xf32>
    %77 = arith.mulf %45, %76 : vector<8x128xf32>
    %cst_22 = arith.constant 0.000000e+00 : f32
    %78 = vector.broadcast %cst_22 : f32 to vector<8x128xf32>
    %79 = arith.select %75, %77, %78 : vector<8x128xi1>, vector<8x128xf32>
    %80 = arith.extui %72 : vector<8x128xi1> to vector<8x128xi32>
    %81 = arith.sitofp %80 : vector<8x128xi32> to vector<8x128xf32>
    %c0_23 = arith.constant 0 : index
    %c0_24 = arith.constant 0 : index
    %82 = vector.load %arg7[%c0_23, %c0_24] : memref<8x128xf32, #tpu.memory_space<vmem>>, vector<8x128xf32>
    tpu.vector_store %arg7[%c0_23, %c0_24], %81 {strides = array<i32>} : memref<8x128xf32, #tpu.memory_space<vmem>>, vector<8x128xf32>,
    %c0_25 = arith.constant 0 : index
    %c0_26 = arith.constant 0 : index
    %83 = vector.load %arg5[%c0_25, %c0_26] : memref<8x128xf32, #tpu.memory_space<vmem>>, vector<8x128xf32>
    tpu.vector_store %arg5[%c0_25, %c0_26], %79 {strides = array<i32>} : memref<8x128xf32, #tpu.memory_space<vmem>>, vector<8x128xf32>,
    return
  }
  func.func @transform_0(%arg0: i32, %arg1: memref<1xi32, #tpu.memory_space<smem>>) -> (i32, i32) {
    %c0_i32 = arith.constant 0 : i32
    %c0_i32_0 = arith.constant 0 : i32
    return %arg0, %c0_i32 : i32, i32
  }
  func.func @transform_1(%arg0: i32, %arg1: memref<1xi32, #tpu.memory_space<smem>>) -> (i32, i32) {
    %c0_i32 = arith.constant 0 : i32
    %c0_i32_0 = arith.constant 0 : i32
    %c0_i32_1 = arith.constant 0 : i32
    return %c0_i32, %c0_i32_0 : i32, i32
  }
  func.func @transform_2(%arg0: i32, %arg1: memref<1xi32, #tpu.memory_space<smem>>) -> (i32, i32) {
    %c0_i32 = arith.constant 0 : i32
    %c0_i32_0 = arith.constant 0 : i32
    %c0_i32_1 = arith.constant 0 : i32
    return %c0_i32, %c0_i32_0 : i32, i32
  }
  func.func @transform_3(%arg0: i32, %arg1: memref<1xi32, #tpu.memory_space<smem>>) -> (i32, i32) {
    %c0_i32 = arith.constant 0 : i32
    %c0_i32_0 = arith.constant 0 : i32
    return %arg0, %c0_i32 : i32, i32
  }
  func.func @transform_4(%arg0: i32, %arg1: memref<1xi32, #tpu.memory_space<smem>>) -> (i32, i32) {
    %c0_i32 = arith.constant 0 : i32
    %c0_i32_0 = arith.constant 0 : i32
    return %arg0, %c0_i32 : i32, i32
  }
  func.func @transform_5(%arg0: i32, %arg1: memref<1xi32, #tpu.memory_space<smem>>) -> (i32, i32) {
    %c0_i32 = arith.constant 0 : i32
    %c0_i32_0 = arith.constant 0 : i32
    return %arg0, %c0_i32 : i32, i32
  }
}

</mosaic_0001>

<llo_original>
// kernel: tpu_custom_call.1
$region0: #{tpu_custom_call.1}
  #allocation0 [shape = 'u32[]', space=smem, size = 0x4, offset = 0x4, fixed_abs, tag = 'smem constant byte address 0x4 - core index']
  #allocation1 [shape = 'u32[144,128]{1,0:T(1,128)}', space=vmem, size = 0x12000, scoped, tag = 'internal scratch']
  #allocation2 [shape = 's32[1]{0}', space=sflag, size = 0x4, scoped, tag = 'scoped memory for tpu_custom_call.1']
  #allocation3 [shape = 's32[1]{0:T(128)S(6)}', space=smem, size = 0x200, scoped, tag = 'prefetched SMEM operand 0']
  %s0 = inlined_call_operand.<no memory space> [shape: s32[1], index: 0, kind: input, shape index: {}]
  %s1 = inlined_call_operand.hbm [shape: f32[8,128], index: 1, kind: input, shape index: {}]
  %s2 = inlined_call_operand.hbm [shape: bf16[128,128], index: 2, kind: input, shape index: {}]
  %s3 = inlined_call_operand.hbm [shape: bf16[128,128], index: 3, kind: input, shape index: {}]
  %s4 = inlined_call_operand.hbm [shape: f32[8,128], index: 4, kind: output, shape index: {0}]
  %s5 = inlined_call_operand.hbm [shape: f32[8,128], index: 5, kind: output, shape index: {1}]
  %s6 = inlined_call_operand.hbm [shape: f32[8,128], index: 6, kind: output, shape index: {2}]
  %7 = xla_tuple %s4, %s5, %s6
  %s8 = sld [smem:[#allocation0]]
  $region50: #{tpu_custom_call.1} parent=0
    _
  %s10 = ssub.s32 1, %s8
  %s11 = scalar_select 0, %s10, %s8
  %12 = sst [smem:[#allocation3]] %s0
  $region1: #{tpu_custom_call.1} parent=0
    #allocation4 [shape = 'u8[4096]{0}', space=vmem, size = 0x1000, scoped, tag = 'input window, operand 1, single buffered']
    #allocation5 [shape = 's32[1]{0}', space=sflag, size = 0x4, scoped, tag = 'scoped memory for tpu_custom_call.1']
    #allocation6 [shape = 's32[1]{0}', space=sflag, size = 0x4, scoped, tag = 'scoped memory for tpu_custom_call.1']
    #allocation7 [shape = 'u8[32768]{0}', space=vmem, size = 0x8000, scoped, tag = 'input window, operand 2, single buffered']
    #allocation8 [shape = 's32[1]{0}', space=sflag, size = 0x4, scoped, tag = 'scoped memory for tpu_custom_call.1']
    #allocation9 [shape = 'u8[32768]{0}', space=vmem, size = 0x8000, scoped, tag = 'input window, operand 3, single buffered']
    #allocation10 [shape = 'u8[4096]{0}', space=vmem, size = 0x1000, scoped, tag = 'output window, operand 0, single buffered']
    #allocation11 [shape = 'u8[4096]{0}', space=vmem, size = 0x1000, scoped, tag = 'output window, operand 1, single buffered']
    #allocation12 [shape = 's32[1]{0}', space=sflag, size = 0x4, scoped, tag = 'scoped memory for tpu_custom_call.1']
    #allocation13 [shape = 'u8[4096]{0}', space=vmem, size = 0x1000, scoped, tag = 'output window, operand 2, single buffered']
    %13 = vsyncpa [#allocation5], 0
    %14 = vsyncpa [#allocation8], 0
    %15 = vsyncpa [#allocation6], 0
    %16 = vsyncpa [#allocation12], 0
    // Predicated region
    $region2: #{tpu_custom_call.1} parent=1 // pred_check
      _
    $region3: #{tpu_custom_call.1} parent=1 // pred_check_branch
      %18 = sbr.rel (0) target = $region5
    $region4: #{tpu_custom_call.1} parent=1 // pred_region
      %s20 = ssub.s32 128, 128
      %21 = vsyncadd [#allocation5], %s20
      %s23 = sshll.u32 [#allocation4], 4
      %s24 = int_to_ptr.vmem [resolvable:$true] %s23
      %26 = dma.hbm_to_vmem [thread:$0]  %s1, 128, %s24, [#allocation5]
    $region5: #{tpu_custom_call.1} parent=1 // pred_fallthru
      _
    // Predicated region
    $region6: #{tpu_custom_call.1} parent=1 // pred_check
      _
    $region7: #{tpu_custom_call.1} parent=1 // pred_check_branch
      %28 = sbr.rel (0) target = $region9
    $region8: #{tpu_custom_call.1} parent=1 // pred_region
      %s30 = ssub.s32 1024, 1024
      %31 = vsyncadd [#allocation8], %s30
      %s32 = sshll.u32 [#allocation7], 4
      %s33 = int_to_ptr.vmem [resolvable:$true] %s32
      %38 = dma.hbm_to_vmem [thread:$0]  %s2, 1024, %s33, [#allocation8], 64, 64, 4
    $region9: #{tpu_custom_call.1} parent=1 // pred_fallthru
      _
    // Predicated region
    $region10: #{tpu_custom_call.1} parent=1 // pred_check
      _
    $region11: #{tpu_custom_call.1} parent=1 // pred_check_branch
      %40 = sbr.rel (0) target = $region13
    $region12: #{tpu_custom_call.1} parent=1 // pred_region
      %s42 = ssub.s32 1024, 1024
      %43 = vsyncadd [#allocation8], %s42
      %s44 = sshll.u32 [#allocation9], 4
      %s45 = int_to_ptr.vmem [resolvable:$true] %s44
      %50 = dma.hbm_to_vmem [thread:$0]  %s3, 1024, %s45, [#allocation8], 64, 64, 4
    $region13: #{tpu_custom_call.1} parent=1 // pred_fallthru
      _
    // Predicated region
    $region14: #{tpu_custom_call.1} parent=1 // pred_check
      _
    $region15: #{tpu_custom_call.1} parent=1 // pred_check_branch
      %52 = sbr.rel (0) target = $region17
    $region16: #{tpu_custom_call.1} parent=1 // pred_region
      %53 = dma.done [#allocation5], 128
    $region17: #{tpu_custom_call.1} parent=1 // pred_fallthru
      _
    // Predicated region
    $region18: #{tpu_custom_call.1} parent=1 // pred_check
      _
    $region19: #{tpu_custom_call.1} parent=1 // pred_check_branch
      %55 = sbr.rel (0) target = $region21
    $region20: #{tpu_custom_call.1} parent=1 // pred_region
      %56 = dma.done [#allocation8], 1024
    $region21: #{tpu_custom_call.1} parent=1 // pred_fallthru
      _
    // Predicated region
    $region22: #{tpu_custom_call.1} parent=1 // pred_check
      _
    $region23: #{tpu_custom_call.1} parent=1 // pred_check_branch
      %58 = sbr.rel (0) target = $region25
    $region24: #{tpu_custom_call.1} parent=1 // pred_region
      %59 = dma.done [#allocation8], 1024
    $region25: #{tpu_custom_call.1} parent=1 // pred_fallthru
      _
    %s61 = sld [smem:[#allocation3]]
    %s62 = smul.u32 0, 8
    %v63 = vld [vmem:[#allocation4] sm:$0xff]
    %v64 = vpack.c.bf16 %v63, %v63
    %v65 = vld [vmem:[#allocation7] sm:$0xf]
    %v66 = vld [vmem:[#allocation7 + $0x4] sm:$0xf]
    %v67 = vld [vmem:[#allocation7 + $0x8] sm:$0xf]
    %v68 = vld [vmem:[#allocation7 + $0xc] sm:$0xf]
    %v69 = vld [vmem:[#allocation7 + $0x10] sm:$0xf]
    %v70 = vld [vmem:[#allocation7 + $0x14] sm:$0xf]
    %v71 = vld [vmem:[#allocation7 + $0x18] sm:$0xf]
    %v72 = vld [vmem:[#allocation7 + $0x1c] sm:$0xf]
    %v73 = vld [vmem:[#allocation7 + $0x20] sm:$0xf]
    %v74 = vld [vmem:[#allocation7 + $0x24] sm:$0xf]
    %v75 = vld [vmem:[#allocation7 + $0x28] sm:$0xf]
    %v76 = vld [vmem:[#allocation7 + $0x2c] sm:$0xf]
    %v77 = vld [vmem:[#allocation7 + $0x30] sm:$0xf]
    %v78 = vld [vmem:[#allocation7 + $0x34] sm:$0xf]
    %v79 = vld [vmem:[#allocation7 + $0x38] sm:$0xf]
    %v80 = vld [vmem:[#allocation7 + $0x3c] sm:$0xf]
    %v97 = vunpack.c.l.b16 %v65
    %v98 = vunpack.c.l.b16 %v66
    %v99 = vunpack.c.l.b16 %v67
    %v100 = vunpack.c.l.b16 %v68
    %v101 = vunpack.c.l.b16 %v69
    %v102 = vunpack.c.l.b16 %v70
    %v103 = vunpack.c.l.b16 %v71
    %v104 = vunpack.c.l.b16 %v72
    %v105 = vunpack.c.l.b16 %v73
    %v106 = vunpack.c.l.b16 %v74
    %v107 = vunpack.c.l.b16 %v75
    %v108 = vunpack.c.l.b16 %v76
    %v109 = vunpack.c.l.b16 %v77
    %v110 = vunpack.c.l.b16 %v78
    %v111 = vunpack.c.l.b16 %v79
    %v112 = vunpack.c.l.b16 %v80
    %v113 = vpack.c.b16 %v98, %v97
    %v114 = vpack.c.b16 %v100, %v99
    %v115 = vpack.c.b16 %v102, %v101
    %v116 = vpack.c.b16 %v104, %v103
    %v117 = vpack.c.b16 %v106, %v105
    %v118 = vpack.c.b16 %v108, %v107
    %v119 = vpack.c.b16 %v110, %v109
    %v120 = vpack.c.b16 %v112, %v111
    %129 = vmatprep.subr.bf16.mxu0 0
    %130 = vmatpush1.bf16.msra.mxu0 %v113
    %131 = vmatprep.subr.bf16.mxu0 0
    %132 = vmatpush1.bf16.msra.mxu0 %v114
    %133 = vmatprep.subr.bf16.mxu0 0
    %134 = vmatpush1.bf16.msra.mxu0 %v115
    %135 = vmatprep.subr.bf16.mxu0 0
    %136 = vmatpush1.bf16.msra.mxu0 %v116
    %137 = vmatprep.subr.bf16.mxu0 0
    %138 = vmatpush1.bf16.msra.mxu0 %v117
    %139 = vmatprep.subr.bf16.mxu0 0
    %140 = vmatpush1.bf16.msra.mxu0 %v118
    %141 = vmatprep.subr.bf16.mxu0 0
    %142 = vmatpush1.bf16.msra.mxu0 %v119
    %143 = vmatprep.subr.bf16.mxu0 0
    %144 = vmatpush1.bf16.msra.mxu0 %v120
    %145 = vmatprep.subr.bf16.mxu0 0
    %146 = vmatpush1.bf16.msra.mxu0 0
    %147 = vmatprep.subr.bf16.mxu0 0
    %148 = vmatpush1.bf16.msra.mxu0 0
    %149 = vmatprep.subr.bf16.mxu0 0
    %150 = vmatpush1.bf16.msra.mxu0 0
    %151 = vmatprep.subr.bf16.mxu0 0
    %152 = vmatpush1.bf16.msra.mxu0 0
    %153 = vmatprep.subr.bf16.mxu0 0
    %154 = vmatpush1.bf16.msra.mxu0 0
    %155 = vmatprep.subr.bf16.mxu0 0
    %156 = vmatpush1.bf16.msra.mxu0 0
    %157 = vmatprep.subr.bf16.mxu0 0
    %158 = vmatpush1.bf16.msra.mxu0 0
    %159 = vmatprep.subr.bf16.mxu0 0
    %160 = vmatpush1.bf16.msra.mxu0 0
    %161 = vmatprep.mubr.bf16.mxu0 0
    %162 = vmatmul.mubr.bf16.gmra.mrb[0].mxu0 %v64
    %v163 = vpop.f32.mrb[0].mxu0
    %v164 = vadd.f32 0.0, %v163
    %v165 = vpop.f32.mrb[0].mxu0
    %v166 = vpop.f32.mrb[0].mxu0
    %v167 = vpop.f32.mrb[0].mxu0
    %168 = vdwg.mxu0
    %v169 = vlaneseq
    %v170 = vshrl.u32 %v169, 7
    %v171 = vstv %s62
    %v172 = vadd.s32 %v170, %v171
    %v173 = vlaneseq
    %v174 = vand.u32 %v173, 127
    %v175 = vmul.u32 %v172, 506832829
    %v176 = vmul.u32 %v174, 668265263
    %v177 = vadd.s32 %v175, %v176
    %v178 = vstv %s61
    %v179 = vadd.s32 %v177, %v178
    %v180 = vadd.s32 %v179, 103988826
    %v181 = vshrl.u32 %v180, 16
    %v182 = vxor.u32 %v180, %v181
    %v183 = vmul.u32 %v182, 73244475
    %v184 = vshrl.u32 %v183, 15
    %v185 = vxor.u32 %v183, %v184
    %v186 = vshrl.u32 %v185, 11
    %v187 = vand.u32 %v186, 1
    %vm188 = vcmp.eq.s32.totalorder %v187, 0
    %vm189 = vcmp.gt.f32.partialorder %v164, 0.0
    %vm190 = vmand %vm188, %vm189
    %v191 = vmul.f32 %v164, 2.0
    %v192 = vsel %vm190, %v191, 0.0
    %v193 = vsel %vm188, 1, 0
    %v194 = vcvt.s32.f32 %v193
    %195 = vst [vmem:[#allocation11] sm:$0xff] %v194
    %v196 = vpack.c.bf16 %v192, %v192
    %v197 = vld [vmem:[#allocation9] sm:$0xf]
    %v198 = vld [vmem:[#allocation9 + $0x4] sm:$0xf]
    %v199 = vld [vmem:[#allocation9 + $0x8] sm:$0xf]
    %v200 = vld [vmem:[#allocation9 + $0xc] sm:$0xf]
    %v201 = vld [vmem:[#allocation9 + $0x10] sm:$0xf]
    %v202 = vld [vmem:[#allocation9 + $0x14] sm:$0xf]
    %v203 = vld [vmem:[#allocation9 + $0x18] sm:$0xf]
    %v204 = vld [vmem:[#allocation9 + $0x1c] sm:$0xf]
    %v205 = vld [vmem:[#allocation9 + $0x20] sm:$0xf]
    %v206 = vld [vmem:[#allocation9 + $0x24] sm:$0xf]
    %v207 = vld [vmem:[#allocation9 + $0x28] sm:$0xf]
    %v208 = vld [vmem:[#allocation9 + $0x2c] sm:$0xf]
    %v209 = vld [vmem:[#allocation9 + $0x30] sm:$0xf]
    %v210 = vld [vmem:[#allocation9 + $0x34] sm:$0xf]
    %v211 = vld [vmem:[#allocation9 + $0x38] sm:$0xf]
    %v212 = vld [vmem:[#allocation9 + $0x3c] sm:$0xf]
    %v229 = vunpack.c.l.b16 %v197
    %v230 = vunpack.c.l.b16 %v198
    %v231 = vunpack.c.l.b16 %v199
    %v232 = vunpack.c.l.b16 %v200
    %v233 = vunpack.c.l.b16 %v201
    %v234 = vunpack.c.l.b16 %v202
    %v235 = vunpack.c.l.b16 %v203
    %v236 = vunpack.c.l.b16 %v204
    %v237 = vunpack.c.l.b16 %v205
    %v238 = vunpack.c.l.b16 %v206
    %v239 = vunpack.c.l.b16 %v207
    %v240 = vunpack.c.l.b16 %v208
    %v241 = vunpack.c.l.b16 %v209
    %v242 = vunpack.c.l.b16 %v210
    %v243 = vunpack.c.l.b16 %v211
    %v244 = vunpack.c.l.b16 %v212
    %v245 = vpack.c.b16 %v230, %v229
    %v246 = vpack.c.b16 %v232, %v231
    %v247 = vpack.c.b16 %v234, %v233
    %v248 = vpack.c.b16 %v236, %v235
    %v249 = vpack.c.b16 %v238, %v237
    %v250 = vpack.c.b16 %v240, %v239
    %v251 = vpack.c.b16 %v242, %v241
    %v252 = vpack.c.b16 %v244, %v243
    %261 = vmatprep.subr.bf16.mxu0 0
    %262 = vmatpush1.bf16.msra.mxu0 %v245
    %263 = vmatprep.subr.bf16.mxu0 0
    %264 = vmatpush1.bf16.msra.mxu0 %v246
    %265 = vmatprep.subr.bf16.mxu0 0
    %266 = vmatpush1.bf16.msra.mxu0 %v247
    %267 = vmatprep.subr.bf16.mxu0 0
    %268 = vmatpush1.bf16.msra.mxu0 %v248
    %269 = vmatprep.subr.bf16.mxu0 0
    %270 = vmatpush1.bf16.msra.mxu0 %v249
    %271 = vmatprep.subr.bf16.mxu0 0
    %272 = vmatpush1.bf16.msra.mxu0 %v250
    %273 = vmatprep.subr.bf16.mxu0 0
    %274 = vmatpush1.bf16.msra.mxu0 %v251
    %275 = vmatprep.subr.bf16.mxu0 0
    %276 = vmatpush1.bf16.msra.mxu0 %v252
    %277 = vmatprep.subr.bf16.mxu0 0
    %278 = vmatpush1.bf16.msra.mxu0 0
    %279 = vmatprep.subr.bf16.mxu0 0
    %280 = vmatpush1.bf16.msra.mxu0 0
    %281 = vmatprep.subr.bf16.mxu0 0
    %282 = vmatpush1.bf16.msra.mxu0 0
    %283 = vmatprep.subr.bf16.mxu0 0
    %284 = vmatpush1.bf16.msra.mxu0 0
    %285 = vmatprep.subr.bf16.mxu0 0
    %286 = vmatpush1.bf16.msra.mxu0 0
    %287 = vmatprep.subr.bf16.mxu0 0
    %288 = vmatpush1.bf16.msra.mxu0 0
    %289 = vmatprep.subr.bf16.mxu0 0
    %290 = vmatpush1.bf16.msra.mxu0 0
    %291 = vmatprep.subr.bf16.mxu0 0
    %292 = vmatpush1.bf16.msra.mxu0 0
    %293 = vmatprep.mubr.bf16.mxu0 0
    %294 = vmatmul.mubr.bf16.gmra.mrb[0].mxu0 %v196
    %v295 = vpop.f32.mrb[0].mxu0
    %v296 = vadd.f32 0.0, %v295
    %v297 = vpop.f32.mrb[0].mxu0
    %v298 = vpop.f32.mrb[0].mxu0
    %v299 = vpop.f32.mrb[0].mxu0
    %300 = vdwg.mxu0
    %v301 = vadd.s32 %v179, 207977652
    %v302 = vshrl.u32 %v301, 16
    %v303 = vxor.u32 %v301, %v302
    %v304 = vmul.u32 %v303, 73244475
    %v305 = vshrl.u32 %v304, 15
    %v306 = vxor.u32 %v304, %v305
    %v307 = vshrl.u32 %v306, 11
    %v308 = vand.u32 %v307, 1
    %vm309 = vcmp.eq.s32.totalorder %v308, 0
    %vm310 = vcmp.gt.f32.partialorder %v296, 0.0
    %vm311 = vmand %vm309, %vm310
    %v312 = vmul.f32 %v296, 2.0
    %v313 = vsel %vm311, %v312, 0.0
    %v314 = vsel %vm309, 1, 0
    %v315 = vcvt.s32.f32 %v314
    %316 = vst [vmem:[#allocation13] sm:$0xff] %v315
    %317 = vst [vmem:[#allocation10] sm:$0xff] %v313
    // Predicated region
    $region26: #{tpu_custom_call.1} parent=1 // pred_check
      _
    $region27: #{tpu_custom_call.1} parent=1 // pred_check_branch
      %319 = sbr.rel (0) target = $region29
    $region28: #{tpu_custom_call.1} parent=1 // pred_region
      %s321 = ssub.s32 128, 128
      %322 = vsyncadd [#allocation6], %s321
      %s324 = sshll.u32 [#allocation10], 4
      %s325 = int_to_ptr.vmem [resolvable:$true] %s324
      %327 = dma.vmem_to_hbm [thread:$0]  %s325, 128, %s4, [#allocation6]
    $region29: #{tpu_custom_call.1} parent=1 // pred_fallthru
      _
    // Predicated region
    $region30: #{tpu_custom_call.1} parent=1 // pred_check
      _
    $region31: #{tpu_custom_call.1} parent=1 // pred_check_branch
      %329 = sbr.rel (0) target = $region33
    $region32: #{tpu_custom_call.1} parent=1 // pred_region
      %s331 = ssub.s32 128, 128
      %332 = vsyncadd [#allocation12], %s331
      %s334 = sshll.u32 [#allocation11], 4
      %s335 = int_to_ptr.vmem [resolvable:$true] %s334
      %337 = dma.vmem_to_hbm [thread:$0]  %s335, 128, %s5, [#allocation12]
    $region33: #{tpu_custom_call.1} parent=1 // pred_fallthru
      _
    // Predicated region
    $region34: #{tpu_custom_call.1} parent=1 // pred_check
      _
    $region35: #{tpu_custom_call.1} parent=1 // pred_check_branch
      %339 = sbr.rel (0) target = $region37
    $region36: #{tpu_custom_call.1} parent=1 // pred_region
      %s341 = ssub.s32 128, 128
      %342 = vsyncadd [#allocation12], %s341
      %s344 = sshll.u32 [#allocation13], 4
      %s345 = int_to_ptr.vmem [resolvable:$true] %s344
      %347 = dma.vmem_to_hbm [thread:$0]  %s345, 128, %s6, [#allocation12]
    $region37: #{tpu_custom_call.1} parent=1 // pred_fallthru
      _
    // Predicated region
    $region38: #{tpu_custom_call.1} parent=1 // pred_check
      _
    $region39: #{tpu_custom_call.1} parent=1 // pred_check_branch
      %349 = sbr.rel (0) target = $region41
    $region40: #{tpu_custom_call.1} parent=1 // pred_region
      %350 = dma.done [#allocation6], 128
    $region41: #{tpu_custom_call.1} parent=1 // pred_fallthru
      _
    // Predicated region
    $region42: #{tpu_custom_call.1} parent=1 // pred_check
      _
    $region43: #{tpu_custom_call.1} parent=1 // pred_check_branch
      %352 = sbr.rel (0) target = $region45
    $region44: #{tpu_custom_call.1} parent=1 // pred_region
      %353 = dma.done [#allocation12], 128
    $region45: #{tpu_custom_call.1} parent=1 // pred_fallthru
      _
    // Predicated region
    $region46: #{tpu_custom_call.1} parent=1 // pred_check
      _
    $region47: #{tpu_custom_call.1} parent=1 // pred_check_branch
      %355 = sbr.rel (0) target = $region49
    $region48: #{tpu_custom_call.1} parent=1 // pred_region
      %356 = dma.done [#allocation12], 128
    $region49: #{tpu_custom_call.1} parent=1 // pred_fallthru
      _
    %357 = vsyncpa [#allocation5], 1
    %358 = vsyncpa [#allocation8], 1
    %359 = vsyncpa [#allocation6], 1
    %360 = vsyncpa [#allocation12], 1

</llo_original>
